<compile_context>
chip_gen: v7x
topology: tpu7x:2x2x1
jax: 0.10.0
libtpu: 0.0.40
codegen_flags: <defaults>
</compile_context>

<pallas_src>
import math

import jax
import jax.numpy as jnp
from jax.experimental import pallas as pl
from jax.experimental.pallas import tpu as pltpu

LANE = 128     # lane width (last dim of a vreg)
SUBLANE = 8    # f32 sublane count


def _round_up(n, m):
    return (n + m - 1) // m * m


def mlp_kernel(x_ref, w1_ref, b1_ref, w2_ref, b2_ref, w3_ref, b3_ref, o_ref):
    # x arrives unpadded f32 (tm, in_dim); cast to bf16 (MXU-native) in-kernel.
    # All matmuls accumulate in f32 (preferred_element_type); bias add + ReLU stay in f32
    # (v5e-friendly); re-cast to bf16 only as the next matmul's operand.
    x = x_ref[...].astype(jnp.bfloat16)

    h1 = jnp.dot(x, w1_ref[...], preferred_element_type=jnp.float32) + b1_ref[...]
    h1 = jnp.maximum(h1, 0.0).astype(jnp.bfloat16)

    h2 = jnp.dot(h1, w2_ref[...], preferred_element_type=jnp.float32) + b2_ref[...]
    h2 = jnp.maximum(h2, 0.0).astype(jnp.bfloat16)

    out = jnp.dot(h2, w3_ref[...], preferred_element_type=jnp.float32) + b3_ref[...]
    o_ref[...] = out.astype(o_ref.dtype)  # lane-dense (…, 128) unmasked store


def mlp_forward(x, padded_params, logical_dims):
    """x: (batch, in_dim) f32 (unpadded).  padded_params: lane-padded bf16 weights / f32 biases.
    logical_dims: (in_dim, hidden_dim, out_dim) of the original (unpadded) MLP."""
    w1, b1, w2, b2, w3, b3 = padded_params
    in_dim, hidden_dim, out_dim = logical_dims
    h_p = w1.shape[1]
    out_p = w3.shape[1]

    batch = x.shape[0]
    assert x.shape[1] == in_dim

    # Step-overhead-bound kernel: make the batch tile as big as practical so the grid collapses
    # (grid=(1,) for batch <= 512).  VMEM footprint at tm=512 is well under 1 MiB, which fits
    # every generation (v7x 64 MiB included).
    tm = min(512, _round_up(batch, SUBLANE))
    b_pad = _round_up(batch, tm)
    grid = (b_pad // tm,)

    if b_pad != batch:  # only pad batch rows when the tile doesn't divide it (not hit in __main__)
        x = jnp.pad(x, ((0, b_pad - batch), (0, 0)))

    # Real (unpadded) work for the scheduler hint.
    flops = 2 * batch * (in_dim * hidden_dim + hidden_dim * hidden_dim + hidden_dim * out_dim)
    bytes_accessed = (
        x.size * 4                                    # f32 activations in (unpadded feature dim)
        + (w1.size + w2.size + w3.size) * 2           # bf16 weights (read once)
        + (b1.size + b2.size + b3.size) * 4           # f32 biases
        + batch * out_dim * 4                         # f32 output actually consumed
    )

    out = pl.pallas_call(
        mlp_kernel,
        out_shape=jax.ShapeDtypeStruct((b_pad, out_p), jnp.float32),
        grid=grid,
        in_specs=[
            pl.BlockSpec((tm, in_dim), lambda i: (i, 0)),    # x: tiled over batch, unpadded K
            pl.BlockSpec((in_dim, h_p), lambda i: (0, 0)),   # w1: VMEM-resident (DMA'd once)
            pl.BlockSpec((1, h_p), lambda i: (0, 0)),        # b1: resident
            pl.BlockSpec((h_p, h_p), lambda i: (0, 0)),      # w2: resident
            pl.BlockSpec((1, h_p), lambda i: (0, 0)),        # b2: resident
            pl.BlockSpec((h_p, out_p), lambda i: (0, 0)),    # w3: resident
            pl.BlockSpec((1, out_p), lambda i: (0, 0)),      # b3: resident
        ],
        out_specs=pl.BlockSpec((tm, out_p), lambda i: (i, 0)),
        compiler_params=pltpu.CompilerParams(
            dimension_semantics=("parallel",),               # megacore-shardable if grid > 1
            vmem_limit_bytes=32 * 1024 * 1024,               # generous; actual usage << 1 MiB
        ),
        cost_estimate=pl.CostEstimate(
            flops=flops, transcendentals=0, bytes_accessed=bytes_accessed),
    )(x, w1, b1, w2, b2, w3, b3)

    return out[:batch, :out_dim]


def xavier_uniform(key, fan_in, fan_out, gain):
    # Matches torch.nn.init.xavier_uniform_ (uniform in [-a, a]); stored as
    # (fan_in, fan_out) == transpose of PyTorch's (out, in) layout.
    a = gain * math.sqrt(6.0 / (fan_in + fan_out))
    return jax.random.uniform(
        key, (fan_in, fan_out), dtype=jnp.float32, minval=-a, maxval=a)


def init_params(key, in_dim, hidden_dim, out_dim):
    gain = math.sqrt(2.0)  # nn.init.calculate_gain('relu')
    k1, k2, k3 = jax.random.split(key, 3)
    w1 = xavier_uniform(k1, in_dim, hidden_dim, gain)
    b1 = jnp.full((1, hidden_dim), 0.01, dtype=jnp.float32)
    w2 = xavier_uniform(k2, hidden_dim, hidden_dim, gain)
    b2 = jnp.full((1, hidden_dim), 0.01, dtype=jnp.float32)
    w3 = xavier_uniform(k3, hidden_dim, out_dim, gain)
    b3 = jnp.full((1, out_dim), 0.01, dtype=jnp.float32)
    return (w1, b1, w2, b2, w3, b3)


def pad_params(params):
    """Lane-pad hidden/output feature dims to 128; weights -> bf16, biases stay f32.
    The input feature dim (w1 rows) is kept unpadded: 16 rows is a legal bf16 sublane tile.
    Zero padding is exact: padded hidden units are ReLU(0 + 0) = 0 and contribute nothing
    downstream; padded output columns are sliced off in the wrapper."""
    w1, b1, w2, b2, w3, b3 = params
    in_dim, hidden_dim = w1.shape
    out_dim = w3.shape[1]
    h_p = _round_up(hidden_dim, LANE)
    out_p = _round_up(out_dim, LANE)

    def pad2(a, rows, cols, dtype):
        out = jnp.zeros((rows, cols), dtype=dtype)
        return out.at[: a.shape[0], : a.shape[1]].set(a.astype(dtype))

    return (
        pad2(w1, in_dim, h_p, jnp.bfloat16),   # K stays unpadded (16)
        pad2(b1, 1, h_p, jnp.float32),
        pad2(w2, h_p, h_p, jnp.bfloat16),
        pad2(b2, 1, h_p, jnp.float32),
        pad2(w3, h_p, out_p, jnp.bfloat16),
        pad2(b3, 1, out_p, jnp.float32),
    )


if __name__ == "__main__":
    in_dim, hidden_dim, out_dim = 16, 64, 8
    batch = 256  # amortize per-call overhead; tm=256 -> grid=(1,)

    key = jax.random.PRNGKey(0)
    k_params, k_x = jax.random.split(key)

    params = init_params(k_params, in_dim, hidden_dim, out_dim)
    padded = pad_params(params)
    x = jax.random.normal(k_x, (batch, in_dim), dtype=jnp.float32)

    out = jax.block_until_ready(
        mlp_forward(x, padded, (in_dim, hidden_dim, out_dim)))

    # Pure-JAX reference with the same numerics (bf16 operands, f32 accumulation).
    w1, b1, w2, b2, w3, b3 = params
    xb = x.astype(jnp.bfloat16)
    h1 = jnp.maximum(
        jnp.dot(xb, w1.astype(jnp.bfloat16), preferred_element_type=jnp.float32) + b1, 0.0
    ).astype(jnp.bfloat16)
    h2 = jnp.maximum(
        jnp.dot(h1, w2.astype(jnp.bfloat16), preferred_element_type=jnp.float32) + b2, 0.0
    ).astype(jnp.bfloat16)
    ref = jnp.dot(h2, w3.astype(jnp.bfloat16), preferred_element_type=jnp.float32) + b3

    assert out.shape == (batch, out_dim)
    max_err = float(jnp.max(jnp.abs(out - ref)))
    assert jnp.allclose(out, ref, atol=2e-3, rtol=2e-3), max_err

    print("KERNEL_OK")
</pallas_src>

<mosaic_0001>
module attributes {stable_mosaic.version = 11 : i64} {
  func.func @mlp_kernel(%arg0: i32, %arg1: memref<256x16xf32, #tpu.memory_space<vmem>>, %arg2: memref<16x128xbf16, #tpu.memory_space<vmem>>, %arg3: memref<1x128xf32, #tpu.memory_space<vmem>>, %arg4: memref<128x128xbf16, #tpu.memory_space<vmem>>, %arg5: memref<1x128xf32, #tpu.memory_space<vmem>>, %arg6: memref<128x128xbf16, #tpu.memory_space<vmem>>, %arg7: memref<1x128xf32, #tpu.memory_space<vmem>>, %arg8: memref<256x128xf32, #tpu.memory_space<vmem>>) attributes {dimension_semantics = [#tpu.dimension_semantics<parallel>], iteration_bounds = array<i64: 1>, scalar_prefetch = 0 : i64, scratch_operands = 0 : i64, tpu.core_type = #tpu.core_type<tc>, window_params = [{transform_indices = @transform_0, window_bounds = array<i64: 256, 16>}, {pipeline_mode = #tpu.pipeline_mode<synchronous>, transform_indices = @transform_1, window_bounds = array<i64: 16, 128>}, {pipeline_mode = #tpu.pipeline_mode<synchronous>, transform_indices = @transform_2, window_bounds = array<i64: 1, 128>}, {pipeline_mode = #tpu.pipeline_mode<synchronous>, transform_indices = @transform_3, window_bounds = array<i64: 128, 128>}, {pipeline_mode = #tpu.pipeline_mode<synchronous>, transform_indices = @transform_4, window_bounds = array<i64: 1, 128>}, {pipeline_mode = #tpu.pipeline_mode<synchronous>, transform_indices = @transform_5, window_bounds = array<i64: 128, 128>}, {pipeline_mode = #tpu.pipeline_mode<synchronous>, transform_indices = @transform_6, window_bounds = array<i64: 1, 128>}, {transform_indices = @transform_7, window_bounds = array<i64: 256, 128>}]} {
    %c0 = arith.constant 0 : index
    %c0_0 = arith.constant 0 : index
    %0 = vector.load %arg1[%c0, %c0_0] : memref<256x16xf32, #tpu.memory_space<vmem>>, vector<256x16xf32>
    %1 = arith.truncf %0 : vector<256x16xf32> to vector<256x16xbf16>
    %c0_1 = arith.constant 0 : index
    %c0_2 = arith.constant 0 : index
    %2 = vector.load %arg2[%c0_1, %c0_2] : memref<16x128xbf16, #tpu.memory_space<vmem>>, vector<16x128xbf16>
    %cst = arith.constant dense<0.000000e+00> : vector<256x128xf32>
    %3 = tpu.matmul %1, %2, %cst {dimension_numbers = #tpu.dot_dimension_numbers<[1], [0], [0], [1], [0, 0, 1, 1], [], []>} : vector<256x16xbf16>, vector<16x128xbf16>, vector<256x128xf32> -> vector<256x128xf32>
    %c0_3 = arith.constant 0 : index
    %c0_4 = arith.constant 0 : index
    %4 = vector.load %arg3[%c0_3, %c0_4] : memref<1x128xf32, #tpu.memory_space<vmem>>, vector<1x128xf32>
    %5 = vector.broadcast %4 : vector<1x128xf32> to vector<256x128xf32>
    %6 = arith.addf %3, %5 : vector<256x128xf32>
    %cst_5 = arith.constant 0.000000e+00 : f32
    %7 = vector.broadcast %cst_5 : f32 to vector<256x128xf32>
    %8 = arith.maximumf %6, %7 : vector<256x128xf32>
    %9 = arith.truncf %8 : vector<256x128xf32> to vector<256x128xbf16>
    %c0_6 = arith.constant 0 : index
    %c0_7 = arith.constant 0 : index
    %10 = vector.load %arg4[%c0_6, %c0_7] : memref<128x128xbf16, #tpu.memory_space<vmem>>, vector<128x128xbf16>
    %cst_8 = arith.constant dense<0.000000e+00> : vector<256x128xf32>
    %11 = tpu.matmul %9, %10, %cst_8 {dimension_numbers = #tpu.dot_dimension_numbers<[1], [0], [0], [1], [0, 0, 1, 1], [], []>} : vector<256x128xbf16>, vector<128x128xbf16>, vector<256x128xf32> -> vector<256x128xf32>
    %c0_9 = arith.constant 0 : index
    %c0_10 = arith.constant 0 : index
    %12 = vector.load %arg5[%c0_9, %c0_10] : memref<1x128xf32, #tpu.memory_space<vmem>>, vector<1x128xf32>
    %13 = vector.broadcast %12 : vector<1x128xf32> to vector<256x128xf32>
    %14 = arith.addf %11, %13 : vector<256x128xf32>
    %cst_11 = arith.constant 0.000000e+00 : f32
    %15 = vector.broadcast %cst_11 : f32 to vector<256x128xf32>
    %16 = arith.maximumf %14, %15 : vector<256x128xf32>
    %17 = arith.truncf %16 : vector<256x128xf32> to vector<256x128xbf16>
    %c0_12 = arith.constant 0 : index
    %c0_13 = arith.constant 0 : index
    %18 = vector.load %arg6[%c0_12, %c0_13] : memref<128x128xbf16, #tpu.memory_space<vmem>>, vector<128x128xbf16>
    %cst_14 = arith.constant dense<0.000000e+00> : vector<256x128xf32>
    %19 = tpu.matmul %17, %18, %cst_14 {dimension_numbers = #tpu.dot_dimension_numbers<[1], [0], [0], [1], [0, 0, 1, 1], [], []>} : vector<256x128xbf16>, vector<128x128xbf16>, vector<256x128xf32> -> vector<256x128xf32>
    %c0_15 = arith.constant 0 : index
    %c0_16 = arith.constant 0 : index
    %20 = vector.load %arg7[%c0_15, %c0_16] : memref<1x128xf32, #tpu.memory_space<vmem>>, vector<1x128xf32>
    %21 = vector.broadcast %20 : vector<1x128xf32> to vector<256x128xf32>
    %22 = arith.addf %19, %21 : vector<256x128xf32>
    %c0_17 = arith.constant 0 : index
    %c0_18 = arith.constant 0 : index
    %23 = vector.load %arg8[%c0_17, %c0_18] : memref<256x128xf32, #tpu.memory_space<vmem>>, vector<256x128xf32>
    tpu.vector_store %arg8[%c0_17, %c0_18], %22 {strides = array<i32>} : memref<256x128xf32, #tpu.memory_space<vmem>>, vector<256x128xf32>,
    return
  }
  func.func @transform_0(%arg0: i32) -> (i32, i32) {
    %c0_i32 = arith.constant 0 : i32
    %c0_i32_0 = arith.constant 0 : i32
    return %arg0, %c0_i32 : i32, i32
  }
  func.func @transform_1(%arg0: i32) -> (i32, i32) {
    %c0_i32 = arith.constant 0 : i32
    %c0_i32_0 = arith.constant 0 : i32
    %c0_i32_1 = arith.constant 0 : i32
    return %c0_i32, %c0_i32_0 : i32, i32
  }
  func.func @transform_2(%arg0: i32) -> (i32, i32) {
    %c0_i32 = arith.constant 0 : i32
    %c0_i32_0 = arith.constant 0 : i32
    %c0_i32_1 = arith.constant 0 : i32
    return %c0_i32, %c0_i32_0 : i32, i32
  }
  func.func @transform_3(%arg0: i32) -> (i32, i32) {
    %c0_i32 = arith.constant 0 : i32
    %c0_i32_0 = arith.constant 0 : i32
    %c0_i32_1 = arith.constant 0 : i32
    return %c0_i32, %c0_i32_0 : i32, i32
  }
  func.func @transform_4(%arg0: i32) -> (i32, i32) {
    %c0_i32 = arith.constant 0 : i32
    %c0_i32_0 = arith.constant 0 : i32
    %c0_i32_1 = arith.constant 0 : i32
    return %c0_i32, %c0_i32_0 : i32, i32
  }
  func.func @transform_5(%arg0: i32) -> (i32, i32) {
    %c0_i32 = arith.constant 0 : i32
    %c0_i32_0 = arith.constant 0 : i32
    %c0_i32_1 = arith.constant 0 : i32
    return %c0_i32, %c0_i32_0 : i32, i32
  }
  func.func @transform_6(%arg0: i32) -> (i32, i32) {
    %c0_i32 = arith.constant 0 : i32
    %c0_i32_0 = arith.constant 0 : i32
    %c0_i32_1 = arith.constant 0 : i32
    return %c0_i32, %c0_i32_0 : i32, i32
  }
  func.func @transform_7(%arg0: i32) -> (i32, i32) {
    %c0_i32 = arith.constant 0 : i32
    %c0_i32_0 = arith.constant 0 : i32
    return %arg0, %c0_i32 : i32, i32
  }
}

</mosaic_0001>

<llo_original>
// kernel: tpu_custom_call.1
$region0: #{tpu_custom_call.1}
  #allocation0 [shape = 'u32[]', space=smem, size = 0x4, offset = 0x4, fixed_abs, tag = 'smem constant byte address 0x4 - core index']
  #allocation1 [shape = 'u32[144,128]{1,0:T(1,128)}', space=vmem, size = 0x12000, scoped, tag = 'internal scratch']
  %s0 = inlined_call_operand.vmem [shape: f32[256,16], index: 0, kind: input, shape index: {}]
  %s1 = inlined_call_operand.vmem [shape: bf16[16,128], index: 1, kind: input, shape index: {}]
  %s2 = inlined_call_operand.vmem [shape: f32[1,128], index: 2, kind: input, shape index: {}]
  %s3 = inlined_call_operand.vmem [shape: bf16[128,128], index: 3, kind: input, shape index: {}]
  %s4 = inlined_call_operand.vmem [shape: f32[1,128], index: 4, kind: input, shape index: {}]
  %s5 = inlined_call_operand.vmem [shape: bf16[128,128], index: 5, kind: input, shape index: {}]
  %s6 = inlined_call_operand.vmem [shape: f32[1,128], index: 6, kind: input, shape index: {}]
  %s7 = inlined_call_operand.hbm [shape: f32[256,128], index: 7, kind: output, shape index: {}]
  %s8 = sld [smem:[#allocation0]]
  $region38: #{tpu_custom_call.1} parent=0
    _
  %s10 = ssub.s32 1, %s8
  %s11 = scalar_select 0, %s10, %s8
  $region1: #{tpu_custom_call.1} parent=0
    #allocation2 [shape = 'u8[131072]{0}', space=vmem, size = 0x20000, scoped, tag = 'output window, operand 0, single buffered']
    #allocation3 [shape = 's32[1]{0}', space=sflag, size = 0x4, scoped, tag = 'scoped memory for tpu_custom_call.1']
    %12 = vsyncpa [#allocation3], 0
    // Predicated region
    $region2: #{tpu_custom_call.1} parent=1 // pred_check
      _
    $region3: #{tpu_custom_call.1} parent=1 // pred_check_branch
      %14 = sbr.rel (0) target = $region5
    $region4: #{tpu_custom_call.1} parent=1 // pred_region
      _
    $region5: #{tpu_custom_call.1} parent=1 // pred_fallthru
      _
    // Predicated region
    $region6: #{tpu_custom_call.1} parent=1 // pred_check
      _
    $region7: #{tpu_custom_call.1} parent=1 // pred_check_branch
      %16 = sbr.rel (0) target = $region9
    $region8: #{tpu_custom_call.1} parent=1 // pred_region
      _
    $region9: #{tpu_custom_call.1} parent=1 // pred_fallthru
      _
    // Predicated region
    $region10: #{tpu_custom_call.1} parent=1 // pred_check
      _
    $region11: #{tpu_custom_call.1} parent=1 // pred_check_branch
      %18 = sbr.rel (0) target = $region13
    $region12: #{tpu_custom_call.1} parent=1 // pred_region
      _
    $region13: #{tpu_custom_call.1} parent=1 // pred_fallthru
      _
    // Predicated region
    $region14: #{tpu_custom_call.1} parent=1 // pred_check
      _
    $region15: #{tpu_custom_call.1} parent=1 // pred_check_branch
      %20 = sbr.rel (0) target = $region17
    $region16: #{tpu_custom_call.1} parent=1 // pred_region
      _
    $region17: #{tpu_custom_call.1} parent=1 // pred_fallthru
      _
    // Predicated region
    $region18: #{tpu_custom_call.1} parent=1 // pred_check
      _
    $region19: #{tpu_custom_call.1} parent=1 // pred_check_branch
      %22 = sbr.rel (0) target = $region21
    $region20: #{tpu_custom_call.1} parent=1 // pred_region
      _
    $region21: #{tpu_custom_call.1} parent=1 // pred_fallthru
      _
    // Predicated region
    $region22: #{tpu_custom_call.1} parent=1 // pred_check
      _
    $region23: #{tpu_custom_call.1} parent=1 // pred_check_branch
      %24 = sbr.rel (0) target = $region25
    $region24: #{tpu_custom_call.1} parent=1 // pred_region
      _
    $region25: #{tpu_custom_call.1} parent=1 // pred_fallthru
      _
    // Predicated region
    $region26: #{tpu_custom_call.1} parent=1 // pred_check
      _
    $region27: #{tpu_custom_call.1} parent=1 // pred_check_branch
      %26 = sbr.rel (0) target = $region29
    $region28: #{tpu_custom_call.1} parent=1 // pred_region
      _
    $region29: #{tpu_custom_call.1} parent=1 // pred_fallthru
      _
    %v28 = vld [vmem:[%s0] sm:$0xff]
    %v29 = vld [vmem:[%s0 + $0x8] sm:$0xff]
    %v30 = vld [vmem:[%s0 + $0x10] sm:$0xff]
    %v31 = vld [vmem:[%s0 + $0x18] sm:$0xff]
    %v32 = vld [vmem:[%s0 + $0x20] sm:$0xff]
    %v33 = vld [vmem:[%s0 + $0x28] sm:$0xff]
    %v34 = vld [vmem:[%s0 + $0x30] sm:$0xff]
    %v35 = vld [vmem:[%s0 + $0x38] sm:$0xff]
    %v36 = vld [vmem:[%s0 + $0x40] sm:$0xff]
    %v37 = vld [vmem:[%s0 + $0x48] sm:$0xff]
    %v38 = vld [vmem:[%s0 + $0x50] sm:$0xff]
    %v39 = vld [vmem:[%s0 + $0x58] sm:$0xff]
    %v40 = vld [vmem:[%s0 + $0x60] sm:$0xff]
    %v41 = vld [vmem:[%s0 + $0x68] sm:$0xff]
    %v42 = vld [vmem:[%s0 + $0x70] sm:$0xff]
    %v43 = vld [vmem:[%s0 + $0x78] sm:$0xff]
    %v44 = vld [vmem:[%s0 + $0x80] sm:$0xff]
    %v45 = vld [vmem:[%s0 + $0x88] sm:$0xff]
    %v46 = vld [vmem:[%s0 + $0x90] sm:$0xff]
    %v47 = vld [vmem:[%s0 + $0x98] sm:$0xff]
    %v48 = vld [vmem:[%s0 + $0xa0] sm:$0xff]
    %v49 = vld [vmem:[%s0 + $0xa8] sm:$0xff]
    %v50 = vld [vmem:[%s0 + $0xb0] sm:$0xff]
    %v51 = vld [vmem:[%s0 + $0xb8] sm:$0xff]
    %v52 = vld [vmem:[%s0 + $0xc0] sm:$0xff]
    %v53 = vld [vmem:[%s0 + $0xc8] sm:$0xff]
    %v54 = vld [vmem:[%s0 + $0xd0] sm:$0xff]
    %v55 = vld [vmem:[%s0 + $0xd8] sm:$0xff]
    %v56 = vld [vmem:[%s0 + $0xe0] sm:$0xff]
    %v57 = vld [vmem:[%s0 + $0xe8] sm:$0xff]
    %v58 = vld [vmem:[%s0 + $0xf0] sm:$0xff]
    %v59 = vld [vmem:[%s0 + $0xf8] sm:$0xff]
    %v60 = vpack.c.bf16 %v29, %v28
    %v61 = vpack.c.bf16 %v31, %v30
    %v62 = vpack.c.bf16 %v33, %v32
    %v63 = vpack.c.bf16 %v35, %v34
    %v64 = vpack.c.bf16 %v37, %v36
    %v65 = vpack.c.bf16 %v39, %v38
    %v66 = vpack.c.bf16 %v41, %v40
    %v67 = vpack.c.bf16 %v43, %v42
    %v68 = vpack.c.bf16 %v45, %v44
    %v69 = vpack.c.bf16 %v47, %v46
    %v70 = vpack.c.bf16 %v49, %v48
    %v71 = vpack.c.bf16 %v51, %v50
    %v72 = vpack.c.bf16 %v53, %v52
    %v73 = vpack.c.bf16 %v55, %v54
    %v74 = vpack.c.bf16 %v57, %v56
    %v75 = vpack.c.bf16 %v59, %v58
    %v76 = vld [vmem:[%s1] sm:$0xf]
    %v77 = vld [vmem:[%s1 + $0x4] sm:$0xf]
    %v78 = vld [vmem:[%s2] sm:$0x1]
    %v80 = vlaneseq
    %v81 = vshrl.u32 %v80, 7
    %v82 = vsub.s32 0, %v81
    %v83 = vrot.slane %v78, %v82
    %v87 = vunpack.c.l.b16 %v76
    %v88 = vunpack.c.l.b16 %v77
    %v89 = vpack.c.b16 %v88, %v87
    %vm91 = vcmask 130048
    %v93 = vsel %vm91, %v60, 0
    %v96 = vsel %vm91, %v61, 0
    %v99 = vsel %vm91, %v62, 0
    %v102 = vsel %vm91, %v63, 0
    %v105 = vsel %vm91, %v64, 0
    %v108 = vsel %vm91, %v65, 0
    %v111 = vsel %vm91, %v66, 0
    %v114 = vsel %vm91, %v67, 0
    %v117 = vsel %vm91, %v68, 0
    %v120 = vsel %vm91, %v69, 0
    %v123 = vsel %vm91, %v70, 0
    %v126 = vsel %vm91, %v71, 0
    %v129 = vsel %vm91, %v72, 0
    %v132 = vsel %vm91, %v73, 0
    %v135 = vsel %vm91, %v74, 0
    %v138 = vsel %vm91, %v75, 0
    %140 = vmatprep.subr.bf16.mxu0 0
    %141 = vmatpush1.bf16.msra.mxu0 %v89
    %142 = vmatprep.subr.bf16.mxu0 0
    %143 = vmatpush1.bf16.msra.mxu0 0
    %144 = vmatprep.subr.bf16.mxu0 0
    %145 = vmatpush1.bf16.msra.mxu0 0
    %146 = vmatprep.subr.bf16.mxu0 0
    %147 = vmatpush1.bf16.msra.mxu0 0
    %148 = vmatprep.subr.bf16.mxu0 0
    %149 = vmatpush1.bf16.msra.mxu0 0
    %150 = vmatprep.subr.bf16.mxu0 0
    %151 = vmatpush1.bf16.msra.mxu0 0
    %152 = vmatprep.subr.bf16.mxu0 0
    %153 = vmatpush1.bf16.msra.mxu0 0
    %154 = vmatprep.subr.bf16.mxu0 0
    %155 = vmatpush1.bf16.msra.mxu0 0
    %156 = vmatprep.subr.bf16.mxu0 0
    %157 = vmatpush1.bf16.msra.mxu0 0
    %158 = vmatprep.subr.bf16.mxu0 0
    %159 = vmatpush1.bf16.msra.mxu0 0
    %160 = vmatprep.subr.bf16.mxu0 0
    %161 = vmatpush1.bf16.msra.mxu0 0
    %162 = vmatprep.subr.bf16.mxu0 0
    %163 = vmatpush1.bf16.msra.mxu0 0
    %164 = vmatprep.subr.bf16.mxu0 0
    %165 = vmatpush1.bf16.msra.mxu0 0
    %166 = vmatprep.subr.bf16.mxu0 0
    %167 = vmatpush1.bf16.msra.mxu0 0
    %168 = vmatprep.subr.bf16.mxu0 0
    %169 = vmatpush1.bf16.msra.mxu0 0
    %170 = vmatprep.subr.bf16.mxu0 0
    %171 = vmatpush1.bf16.msra.mxu0 0
    %172 = vmatprep.mubr.bf16.mxu0 0
    %173 = vmatmul.mubr.bf16.gmra.mrb[0].mxu0 %v93
    %v174 = vpop.f32.mrb[0].mxu0
    %v175 = vadd.f32 %v83, %v174
    %v176 = vpop.f32.mrb[0].mxu0
    %v177 = vpop.f32.mrb[0].mxu0
    %v178 = vadd.f32 %v83, %v177
    %v179 = vpop.f32.mrb[0].mxu0
    %180 = vmatprep.mubr.bf16.mxu0 0
    %181 = vmatmul.mubr.bf16.gmra.mrb[0].mxu0 %v96
    %v182 = vpop.f32.mrb[0].mxu0
    %v183 = vadd.f32 %v83, %v182
    %v184 = vpop.f32.mrb[0].mxu0
    %v185 = vpop.f32.mrb[0].mxu0
    %v186 = vadd.f32 %v83, %v185
    %v187 = vpop.f32.mrb[0].mxu0
    %188 = vmatprep.mubr.bf16.mxu0 0
    %189 = vmatmul.mubr.bf16.gmra.mrb[0].mxu0 %v99
    %v190 = vpop.f32.mrb[0].mxu0
    %v191 = vadd.f32 %v83, %v190
    %v192 = vpop.f32.mrb[0].mxu0
    %v193 = vpop.f32.mrb[0].mxu0
    %v194 = vadd.f32 %v83, %v193
    %v195 = vpop.f32.mrb[0].mxu0
    %196 = vmatprep.mubr.bf16.mxu0 0
    %197 = vmatmul.mubr.bf16.gmra.mrb[0].mxu0 %v102
    %v198 = vpop.f32.mrb[0].mxu0
    %v199 = vadd.f32 %v83, %v198
    %v200 = vpop.f32.mrb[0].mxu0
    %v201 = vpop.f32.mrb[0].mxu0
    %v202 = vadd.f32 %v83, %v201
    %v203 = vpop.f32.mrb[0].mxu0
    %204 = vmatprep.mubr.bf16.mxu0 0
    %205 = vmatmul.mubr.bf16.gmra.mrb[0].mxu0 %v105
    %v206 = vpop.f32.mrb[0].mxu0
    %v207 = vadd.f32 %v83, %v206
    %v208 = vpop.f32.mrb[0].mxu0
    %v209 = vpop.f32.mrb[0].mxu0
    %v210 = vadd.f32 %v83, %v209
    %v211 = vpop.f32.mrb[0].mxu0
    %212 = vmatprep.mubr.bf16.mxu0 0
    %213 = vmatmul.mubr.bf16.gmra.mrb[0].mxu0 %v108
    %v214 = vpop.f32.mrb[0].mxu0
    %v215 = vadd.f32 %v83, %v214
    %v216 = vpop.f32.mrb[0].mxu0
    %v217 = vpop.f32.mrb[0].mxu0
    %v218 = vadd.f32 %v83, %v217
    %v219 = vpop.f32.mrb[0].mxu0
    %220 = vmatprep.mubr.bf16.mxu0 0
    %221 = vmatmul.mubr.bf16.gmra.mrb[0].mxu0 %v111
    %v222 = vpop.f32.mrb[0].mxu0
    %v223 = vadd.f32 %v83, %v222
    %v224 = vpop.f32.mrb[0].mxu0
    %v225 = vpop.f32.mrb[0].mxu0
    %v226 = vadd.f32 %v83, %v225
    %v227 = vpop.f32.mrb[0].mxu0
    %228 = vmatprep.mubr.bf16.mxu0 0
    %229 = vmatmul.mubr.bf16.gmra.mrb[0].mxu0 %v114
    %v230 = vpop.f32.mrb[0].mxu0
    %v231 = vadd.f32 %v83, %v230
    %v232 = vpop.f32.mrb[0].mxu0
    %v233 = vpop.f32.mrb[0].mxu0
    %v234 = vadd.f32 %v83, %v233
    %v235 = vpop.f32.mrb[0].mxu0
    %236 = vmatprep.mubr.bf16.mxu0 0
    %237 = vmatmul.mubr.bf16.gmra.mrb[0].mxu0 %v117
    %v238 = vpop.f32.mrb[0].mxu0
    %v239 = vadd.f32 %v83, %v238
    %v240 = vpop.f32.mrb[0].mxu0
    %v241 = vpop.f32.mrb[0].mxu0
    %v242 = vadd.f32 %v83, %v241
    %v243 = vpop.f32.mrb[0].mxu0
    %244 = vmatprep.mubr.bf16.mxu0 0
    %245 = vmatmul.mubr.bf16.gmra.mrb[0].mxu0 %v120
    %v246 = vpop.f32.mrb[0].mxu0
    %v247 = vadd.f32 %v83, %v246
    %v248 = vpop.f32.mrb[0].mxu0
    %v249 = vpop.f32.mrb[0].mxu0
    %v250 = vadd.f32 %v83, %v249
    %v251 = vpop.f32.mrb[0].mxu0
    %252 = vmatprep.mubr.bf16.mxu0 0
    %253 = vmatmul.mubr.bf16.gmra.mrb[0].mxu0 %v123
    %v254 = vpop.f32.mrb[0].mxu0
    %v255 = vadd.f32 %v83, %v254
    %v256 = vpop.f32.mrb[0].mxu0
    %v257 = vpop.f32.mrb[0].mxu0
    %v258 = vadd.f32 %v83, %v257
    %v259 = vpop.f32.mrb[0].mxu0
    %260 = vmatprep.mubr.bf16.mxu0 0
    %261 = vmatmul.mubr.bf16.gmra.mrb[0].mxu0 %v126
    %v262 = vpop.f32.mrb[0].mxu0
    %v263 = vadd.f32 %v83, %v262
    %v264 = vpop.f32.mrb[0].mxu0
    %v265 = vpop.f32.mrb[0].mxu0
    %v266 = vadd.f32 %v83, %v265
    %v267 = vpop.f32.mrb[0].mxu0
    %268 = vmatprep.mubr.bf16.mxu0 0
    %269 = vmatmul.mubr.bf16.gmra.mrb[0].mxu0 %v129
    %v270 = vpop.f32.mrb[0].mxu0
    %v271 = vadd.f32 %v83, %v270
    %v272 = vpop.f32.mrb[0].mxu0
    %v273 = vpop.f32.mrb[0].mxu0
    %v274 = vadd.f32 %v83, %v273
    %v275 = vpop.f32.mrb[0].mxu0
    %276 = vmatprep.mubr.bf16.mxu0 0
    %277 = vmatmul.mubr.bf16.gmra.mrb[0].mxu0 %v132
    %v278 = vpop.f32.mrb[0].mxu0
    %v279 = vadd.f32 %v83, %v278
    %v280 = vpop.f32.mrb[0].mxu0
    %v281 = vpop.f32.mrb[0].mxu0
    %v282 = vadd.f32 %v83, %v281
    %v283 = vpop.f32.mrb[0].mxu0
    %284 = vmatprep.mubr.bf16.mxu0 0
    %285 = vmatmul.mubr.bf16.gmra.mrb[0].mxu0 %v135
    %v286 = vpop.f32.mrb[0].mxu0
    %v287 = vadd.f32 %v83, %v286
    %v288 = vpop.f32.mrb[0].mxu0
    %v289 = vpop.f32.mrb[0].mxu0
    %v290 = vadd.f32 %v83, %v289
    %v291 = vpop.f32.mrb[0].mxu0
    %292 = vmatprep.mubr.bf16.mxu0 0
    %293 = vmatmul.mubr.bf16.gmra.mrb[0].mxu0 %v138
    %v294 = vpop.f32.mrb[0].mxu0
    %v295 = vadd.f32 %v83, %v294
    %v296 = vpop.f32.mrb[0].mxu0
    %v297 = vpop.f32.mrb[0].mxu0
    %v298 = vadd.f32 %v83, %v297
    %v299 = vpop.f32.mrb[0].mxu0
    %300 = vdwg.mxu0
    %v301 = vmax.f32 %v175, 0.0
    %v302 = vmax.f32 %v178, 0.0
    %v303 = vmax.f32 %v183, 0.0
    %v304 = vmax.f32 %v186, 0.0
    %v305 = vmax.f32 %v191, 0.0
    %v306 = vmax.f32 %v194, 0.0
    %v307 = vmax.f32 %v199, 0.0
    %v308 = vmax.f32 %v202, 0.0
    %v309 = vmax.f32 %v207, 0.0
    %v310 = vmax.f32 %v210, 0.0
    %v311 = vmax.f32 %v215, 0.0
    %v312 = vmax.f32 %v218, 0.0
    %v313 = vmax.f32 %v223, 0.0
    %v314 = vmax.f32 %v226, 0.0
    %v315 = vmax.f32 %v231, 0.0
    %v316 = vmax.f32 %v234, 0.0
    %v317 = vmax.f32 %v239, 0.0
    %v318 = vmax.f32 %v242, 0.0
    %v319 = vmax.f32 %v247, 0.0
    %v320 = vmax.f32 %v250, 0.0
    %v321 = vmax.f32 %v255, 0.0
    %v322 = vmax.f32 %v258, 0.0
    %v323 = vmax.f32 %v263, 0.0
    %v324 = vmax.f32 %v266, 0.0
    %v325 = vmax.f32 %v271, 0.0
    %v326 = vmax.f32 %v274, 0.0
    %v327 = vmax.f32 %v279, 0.0
    %v328 = vmax.f32 %v282, 0.0
    %v329 = vmax.f32 %v287, 0.0
    %v330 = vmax.f32 %v290, 0.0
    %v331 = vmax.f32 %v295, 0.0
    %v332 = vmax.f32 %v298, 0.0
    %v333 = vpack.c.bf16 %v302, %v301
    %v334 = vpack.c.bf16 %v304, %v303
    %v335 = vpack.c.bf16 %v306, %v305
    %v336 = vpack.c.bf16 %v308, %v307
    %v337 = vpack.c.bf16 %v310, %v309
    %v338 = vpack.c.bf16 %v312, %v311
    %v339 = vpack.c.bf16 %v314, %v313
    %v340 = vpack.c.bf16 %v316, %v315
    %v341 = vpack.c.bf16 %v318, %v317
    %v342 = vpack.c.bf16 %v320, %v319
    %v343 = vpack.c.bf16 %v322, %v321
    %v344 = vpack.c.bf16 %v324, %v323
    %v345 = vpack.c.bf16 %v326, %v325
    %v346 = vpack.c.bf16 %v328, %v327
    %v347 = vpack.c.bf16 %v330, %v329
    %v348 = vpack.c.bf16 %v332, %v331
    %v349 = vld [vmem:[%s3] sm:$0xf]
    %v350 = vld [vmem:[%s3 + $0x4] sm:$0xf]
    %v351 = vld [vmem:[%s3 + $0x8] sm:$0xf]
    %v352 = vld [vmem:[%s3 + $0xc] sm:$0xf]
    %v353 = vld [vmem:[%s3 + $0x10] sm:$0xf]
    %v354 = vld [vmem:[%s3 + $0x14] sm:$0xf]
    %v355 = vld [vmem:[%s3 + $0x18] sm:$0xf]
    %v356 = vld [vmem:[%s3 + $0x1c] sm:$0xf]
    %v357 = vld [vmem:[%s3 + $0x20] sm:$0xf]
    %v358 = vld [vmem:[%s3 + $0x24] sm:$0xf]
    %v359 = vld [vmem:[%s3 + $0x28] sm:$0xf]
    %v360 = vld [vmem:[%s3 + $0x2c] sm:$0xf]
    %v361 = vld [vmem:[%s3 + $0x30] sm:$0xf]
    %v362 = vld [vmem:[%s3 + $0x34] sm:$0xf]
    %v363 = vld [vmem:[%s3 + $0x38] sm:$0xf]
    %v364 = vld [vmem:[%s3 + $0x3c] sm:$0xf]
    %v365 = vld [vmem:[%s4] sm:$0x1]
    %v367 = vlaneseq
    %v368 = vshrl.u32 %v367, 7
    %v369 = vsub.s32 0, %v368
    %v370 = vrot.slane %v365, %v369
    %v388 = vunpack.c.l.b16 %v349
    %v389 = vunpack.c.l.b16 %v350
    %v390 = vunpack.c.l.b16 %v351
    %v391 = vunpack.c.l.b16 %v352
    %v392 = vunpack.c.l.b16 %v353
    %v393 = vunpack.c.l.b16 %v354
    %v394 = vunpack.c.l.b16 %v355
    %v395 = vunpack.c.l.b16 %v356
    %v396 = vunpack.c.l.b16 %v357
    %v397 = vunpack.c.l.b16 %v358
    %v398 = vunpack.c.l.b16 %v359
    %v399 = vunpack.c.l.b16 %v360
    %v400 = vunpack.c.l.b16 %v361
    %v401 = vunpack.c.l.b16 %v362
    %v402 = vunpack.c.l.b16 %v363
    %v403 = vunpack.c.l.b16 %v364
    %v404 = vpack.c.b16 %v389, %v388
    %v405 = vpack.c.b16 %v391, %v390
    %v406 = vpack.c.b16 %v393, %v392
    %v407 = vpack.c.b16 %v395, %v394
    %v408 = vpack.c.b16 %v397, %v396
    %v409 = vpack.c.b16 %v399, %v398
    %v410 = vpack.c.b16 %v401, %v400
    %v411 = vpack.c.b16 %v403, %v402
    %420 = vmatprep.subr.bf16.mxu0 0
    %421 = vmatpush1.bf16.msra.mxu0 %v404
    %422 = vmatprep.subr.bf16.mxu0 0
    %423 = vmatpush1.bf16.msra.mxu0 %v405
    %424 = vmatprep.subr.bf16.mxu0 0
    %425 = vmatpush1.bf16.msra.mxu0 %v406
    %426 = vmatprep.subr.bf16.mxu0 0
    %427 = vmatpush1.bf16.msra.mxu0 %v407
    %428 = vmatprep.subr.bf16.mxu0 0
    %429 = vmatpush1.bf16.msra.mxu0 %v408
    %430 = vmatprep.subr.bf16.mxu0 0
    %431 = vmatpush1.bf16.msra.mxu0 %v409
    %432 = vmatprep.subr.bf16.mxu0 0
    %433 = vmatpush1.bf16.msra.mxu0 %v410
    %434 = vmatprep.subr.bf16.mxu0 0
    %435 = vmatpush1.bf16.msra.mxu0 %v411
    %436 = vmatprep.subr.bf16.mxu0 0
    %437 = vmatpush1.bf16.msra.mxu0 0
    %438 = vmatprep.subr.bf16.mxu0 0
    %439 = vmatpush1.bf16.msra.mxu0 0
    %440 = vmatprep.subr.bf16.mxu0 0
    %441 = vmatpush1.bf16.msra.mxu0 0
    %442 = vmatprep.subr.bf16.mxu0 0
    %443 = vmatpush1.bf16.msra.mxu0 0
    %444 = vmatprep.subr.bf16.mxu0 0
    %445 = vmatpush1.bf16.msra.mxu0 0
    %446 = vmatprep.subr.bf16.mxu0 0
    %447 = vmatpush1.bf16.msra.mxu0 0
    %448 = vmatprep.subr.bf16.mxu0 0
    %449 = vmatpush1.bf16.msra.mxu0 0
    %450 = vmatprep.subr.bf16.mxu0 0
    %451 = vmatpush1.bf16.msra.mxu0 0
    %452 = vmatprep.mubr.bf16.mxu0 0
    %453 = vmatmul.mubr.bf16.gmra.mrb[0].mxu0 %v333
    %v454 = vpop.f32.mrb[0].mxu0
    %v455 = vadd.f32 %v370, %v454
    %v456 = vpop.f32.mrb[0].mxu0
    %v457 = vpop.f32.mrb[0].mxu0
    %v458 = vadd.f32 %v370, %v457
    %v459 = vpop.f32.mrb[0].mxu0
    %460 = vmatprep.mubr.bf16.mxu0 0
    %461 = vmatmul.mubr.bf16.gmra.mrb[0].mxu0 %v334
    %v462 = vpop.f32.mrb[0].mxu0
    %v463 = vadd.f32 %v370, %v462
    %v464 = vpop.f32.mrb[0].mxu0
    %v465 = vpop.f32.mrb[0].mxu0
    %v466 = vadd.f32 %v370, %v465
    %v467 = vpop.f32.mrb[0].mxu0
    %468 = vmatprep.mubr.bf16.mxu0 0
    %469 = vmatmul.mubr.bf16.gmra.mrb[0].mxu0 %v335
    %v470 = vpop.f32.mrb[0].mxu0
    %v471 = vadd.f32 %v370, %v470
    %v472 = vpop.f32.mrb[0].mxu0
    %v473 = vpop.f32.mrb[0].mxu0
    %v474 = vadd.f32 %v370, %v473
    %v475 = vpop.f32.mrb[0].mxu0
    %476 = vmatprep.mubr.bf16.mxu0 0
    %477 = vmatmul.mubr.bf16.gmra.mrb[0].mxu0 %v336
    %v478 = vpop.f32.mrb[0].mxu0
    %v479 = vadd.f32 %v370, %v478
    %v480 = vpop.f32.mrb[0].mxu0
    %v481 = vpop.f32.mrb[0].mxu0
    %v482 = vadd.f32 %v370, %v481
    %v483 = vpop.f32.mrb[0].mxu0
    %484 = vmatprep.mubr.bf16.mxu0 0
    %485 = vmatmul.mubr.bf16.gmra.mrb[0].mxu0 %v337
    %v486 = vpop.f32.mrb[0].mxu0
    %v487 = vadd.f32 %v370, %v486
    %v488 = vpop.f32.mrb[0].mxu0
    %v489 = vpop.f32.mrb[0].mxu0
    %v490 = vadd.f32 %v370, %v489
    %v491 = vpop.f32.mrb[0].mxu0
    %492 = vmatprep.mubr.bf16.mxu0 0
    %493 = vmatmul.mubr.bf16.gmra.mrb[0].mxu0 %v338
    %v494 = vpop.f32.mrb[0].mxu0
    %v495 = vadd.f32 %v370, %v494
    %v496 = vpop.f32.mrb[0].mxu0
    %v497 = vpop.f32.mrb[0].mxu0
    %v498 = vadd.f32 %v370, %v497
    %v499 = vpop.f32.mrb[0].mxu0
    %500 = vmatprep.mubr.bf16.mxu0 0
    %501 = vmatmul.mubr.bf16.gmra.mrb[0].mxu0 %v339
    %v502 = vpop.f32.mrb[0].mxu0
    %v503 = vadd.f32 %v370, %v502
    %v504 = vpop.f32.mrb[0].mxu0
    %v505 = vpop.f32.mrb[0].mxu0
    %v506 = vadd.f32 %v370, %v505
    %v507 = vpop.f32.mrb[0].mxu0
    %508 = vmatprep.mubr.bf16.mxu0 0
    %509 = vmatmul.mubr.bf16.gmra.mrb[0].mxu0 %v340
    %v510 = vpop.f32.mrb[0].mxu0
    %v511 = vadd.f32 %v370, %v510
    %v512 = vpop.f32.mrb[0].mxu0
    %v513 = vpop.f32.mrb[0].mxu0
    %v514 = vadd.f32 %v370, %v513
    %v515 = vpop.f32.mrb[0].mxu0
    %516 = vmatprep.mubr.bf16.mxu0 0
    %517 = vmatmul.mubr.bf16.gmra.mrb[0].mxu0 %v341
    %v518 = vpop.f32.mrb[0].mxu0
    %v519 = vadd.f32 %v370, %v518
    %v520 = vpop.f32.mrb[0].mxu0
    %v521 = vpop.f32.mrb[0].mxu0
    %v522 = vadd.f32 %v370, %v521
    %v523 = vpop.f32.mrb[0].mxu0
    %524 = vmatprep.mubr.bf16.mxu0 0
    %525 = vmatmul.mubr.bf16.gmra.mrb[0].mxu0 %v342
    %v526 = vpop.f32.mrb[0].mxu0
    %v527 = vadd.f32 %v370, %v526
    %v528 = vpop.f32.mrb[0].mxu0
    %v529 = vpop.f32.mrb[0].mxu0
    %v530 = vadd.f32 %v370, %v529
    %v531 = vpop.f32.mrb[0].mxu0
    %532 = vmatprep.mubr.bf16.mxu0 0
    %533 = vmatmul.mubr.bf16.gmra.mrb[0].mxu0 %v343
    %v534 = vpop.f32.mrb[0].mxu0
    %v535 = vadd.f32 %v370, %v534
    %v536 = vpop.f32.mrb[0].mxu0
    %v537 = vpop.f32.mrb[0].mxu0
    %v538 = vadd.f32 %v370, %v537
    %v539 = vpop.f32.mrb[0].mxu0
    %540 = vmatprep.mubr.bf16.mxu0 0
    %541 = vmatmul.mubr.bf16.gmra.mrb[0].mxu0 %v344
    %v542 = vpop.f32.mrb[0].mxu0
    %v543 = vadd.f32 %v370, %v542
    %v544 = vpop.f32.mrb[0].mxu0
    %v545 = vpop.f32.mrb[0].mxu0
    %v546 = vadd.f32 %v370, %v545
    %v547 = vpop.f32.mrb[0].mxu0
    %548 = vmatprep.mubr.bf16.mxu0 0
    %549 = vmatmul.mubr.bf16.gmra.mrb[0].mxu0 %v345
    %v550 = vpop.f32.mrb[0].mxu0
    %v551 = vadd.f32 %v370, %v550
    %v552 = vpop.f32.mrb[0].mxu0
    %v553 = vpop.f32.mrb[0].mxu0
    %v554 = vadd.f32 %v370, %v553
    %v555 = vpop.f32.mrb[0].mxu0
    %556 = vmatprep.mubr.bf16.mxu0 0
    %557 = vmatmul.mubr.bf16.gmra.mrb[0].mxu0 %v346
    %v558 = vpop.f32.mrb[0].mxu0
    %v559 = vadd.f32 %v370, %v558
    %v560 = vpop.f32.mrb[0].mxu0
    %v561 = vpop.f32.mrb[0].mxu0
    %v562 = vadd.f32 %v370, %v561
    %v563 = vpop.f32.mrb[0].mxu0
    %564 = vmatprep.mubr.bf16.mxu0 0
    %565 = vmatmul.mubr.bf16.gmra.mrb[0].mxu0 %v347
    %v566 = vpop.f32.mrb[0].mxu0
    %v567 = vadd.f32 %v370, %v566
    %v568 = vpop.f32.mrb[0].mxu0
    %v569 = vpop.f32.mrb[0].mxu0
    %v570 = vadd.f32 %v370, %v569
    %v571 = vpop.f32.mrb[0].mxu0
    %572 = vmatprep.mubr.bf16.mxu0 0
    %573 = vmatmul.mubr.bf16.gmra.mrb[0].mxu0 %v348
    %v574 = vpop.f32.mrb[0].mxu0
    %v575 = vadd.f32 %v370, %v574
    %v576 = vpop.f32.mrb[0].mxu0
    %v577 = vpop.f32.mrb[0].mxu0
    %v578 = vadd.f32 %v370, %v577
    %v579 = vpop.f32.mrb[0].mxu0
    %580 = vdwg.mxu0
    %v581 = vmax.f32 %v455, 0.0
    %v582 = vmax.f32 %v458, 0.0
    %v583 = vmax.f32 %v463, 0.0
    %v584 = vmax.f32 %v466, 0.0
    %v585 = vmax.f32 %v471, 0.0
    %v586 = vmax.f32 %v474, 0.0
    %v587 = vmax.f32 %v479, 0.0
    %v588 = vmax.f32 %v482, 0.0
    %v589 = vmax.f32 %v487, 0.0
    %v590 = vmax.f32 %v490, 0.0
    %v591 = vmax.f32 %v495, 0.0
    %v592 = vmax.f32 %v498, 0.0
    %v593 = vmax.f32 %v503, 0.0
    %v594 = vmax.f32 %v506, 0.0
    %v595 = vmax.f32 %v511, 0.0
    %v596 = vmax.f32 %v514, 0.0
    %v597 = vmax.f32 %v519, 0.0
    %v598 = vmax.f32 %v522, 0.0
    %v599 = vmax.f32 %v527, 0.0
    %v600 = vmax.f32 %v530, 0.0
    %v601 = vmax.f32 %v535, 0.0
    %v602 = vmax.f32 %v538, 0.0
    %v603 = vmax.f32 %v543, 0.0
    %v604 = vmax.f32 %v546, 0.0
    %v605 = vmax.f32 %v551, 0.0
    %v606 = vmax.f32 %v554, 0.0
    %v607 = vmax.f32 %v559, 0.0
    %v608 = vmax.f32 %v562, 0.0
    %v609 = vmax.f32 %v567, 0.0
    %v610 = vmax.f32 %v570, 0.0
    %v611 = vmax.f32 %v575, 0.0
    %v612 = vmax.f32 %v578, 0.0
    %v613 = vpack.c.bf16 %v582, %v581
    %v614 = vpack.c.bf16 %v584, %v583
    %v615 = vpack.c.bf16 %v586, %v585
    %v616 = vpack.c.bf16 %v588, %v587
    %v617 = vpack.c.bf16 %v590, %v589
    %v618 = vpack.c.bf16 %v592, %v591
    %v619 = vpack.c.bf16 %v594, %v593
    %v620 = vpack.c.bf16 %v596, %v595
    %v621 = vpack.c.bf16 %v598, %v597
    %v622 = vpack.c.bf16 %v600, %v599
    %v623 = vpack.c.bf16 %v602, %v601
    %v624 = vpack.c.bf16 %v604, %v603
    %v625 = vpack.c.bf16 %v606, %v605
    %v626 = vpack.c.bf16 %v608, %v607
    %v627 = vpack.c.bf16 %v610, %v609
    %v628 = vpack.c.bf16 %v612, %v611
    %v629 = vld [vmem:[%s5] sm:$0xf]
    %v630 = vld [vmem:[%s5 + $0x4] sm:$0xf]
    %v631 = vld [vmem:[%s5 + $0x8] sm:$0xf]
    %v632 = vld [vmem:[%s5 + $0xc] sm:$0xf]
    %v633 = vld [vmem:[%s5 + $0x10] sm:$0xf]
    %v634 = vld [vmem:[%s5 + $0x14] sm:$0xf]
    %v635 = vld [vmem:[%s5 + $0x18] sm:$0xf]
    %v636 = vld [vmem:[%s5 + $0x1c] sm:$0xf]
    %v637 = vld [vmem:[%s5 + $0x20] sm:$0xf]
    %v638 = vld [vmem:[%s5 + $0x24] sm:$0xf]
    %v639 = vld [vmem:[%s5 + $0x28] sm:$0xf]
    %v640 = vld [vmem:[%s5 + $0x2c] sm:$0xf]
    %v641 = vld [vmem:[%s5 + $0x30] sm:$0xf]
    %v642 = vld [vmem:[%s5 + $0x34] sm:$0xf]
    %v643 = vld [vmem:[%s5 + $0x38] sm:$0xf]
    %v644 = vld [vmem:[%s5 + $0x3c] sm:$0xf]
    %v645 = vld [vmem:[%s6] sm:$0x1]
    %v647 = vlaneseq
    %v648 = vshrl.u32 %v647, 7
    %v649 = vsub.s32 0, %v648
    %v650 = vrot.slane %v645, %v649
    %v668 = vunpack.c.l.b16 %v629
    %v669 = vunpack.c.l.b16 %v630
    %v670 = vunpack.c.l.b16 %v631
    %v671 = vunpack.c.l.b16 %v632
    %v672 = vunpack.c.l.b16 %v633
    %v673 = vunpack.c.l.b16 %v634
    %v674 = vunpack.c.l.b16 %v635
    %v675 = vunpack.c.l.b16 %v636
    %v676 = vunpack.c.l.b16 %v637
    %v677 = vunpack.c.l.b16 %v638
    %v678 = vunpack.c.l.b16 %v639
    %v679 = vunpack.c.l.b16 %v640
    %v680 = vunpack.c.l.b16 %v641
    %v681 = vunpack.c.l.b16 %v642
    %v682 = vunpack.c.l.b16 %v643
    %v683 = vunpack.c.l.b16 %v644
    %v684 = vpack.c.b16 %v669, %v668
    %v685 = vpack.c.b16 %v671, %v670
    %v686 = vpack.c.b16 %v673, %v672
    %v687 = vpack.c.b16 %v675, %v674
    %v688 = vpack.c.b16 %v677, %v676
    %v689 = vpack.c.b16 %v679, %v678
    %v690 = vpack.c.b16 %v681, %v680
    %v691 = vpack.c.b16 %v683, %v682
    %700 = vmatprep.subr.bf16.mxu0 0
    %701 = vmatpush1.bf16.msra.mxu0 %v684
    %702 = vmatprep.subr.bf16.mxu0 0
    %703 = vmatpush1.bf16.msra.mxu0 %v685
    %704 = vmatprep.subr.bf16.mxu0 0
    %705 = vmatpush1.bf16.msra.mxu0 %v686
    %706 = vmatprep.subr.bf16.mxu0 0
    %707 = vmatpush1.bf16.msra.mxu0 %v687
    %708 = vmatprep.subr.bf16.mxu0 0
    %709 = vmatpush1.bf16.msra.mxu0 %v688
    %710 = vmatprep.subr.bf16.mxu0 0
    %711 = vmatpush1.bf16.msra.mxu0 %v689
    %712 = vmatprep.subr.bf16.mxu0 0
    %713 = vmatpush1.bf16.msra.mxu0 %v690
    %714 = vmatprep.subr.bf16.mxu0 0
    %715 = vmatpush1.bf16.msra.mxu0 %v691
    %716 = vmatprep.subr.bf16.mxu0 0
    %717 = vmatpush1.bf16.msra.mxu0 0
    %718 = vmatprep.subr.bf16.mxu0 0
    %719 = vmatpush1.bf16.msra.mxu0 0
    %720 = vmatprep.subr.bf16.mxu0 0
    %721 = vmatpush1.bf16.msra.mxu0 0
    %722 = vmatprep.subr.bf16.mxu0 0
    %723 = vmatpush1.bf16.msra.mxu0 0
    %724 = vmatprep.subr.bf16.mxu0 0
    %725 = vmatpush1.bf16.msra.mxu0 0
    %726 = vmatprep.subr.bf16.mxu0 0
    %727 = vmatpush1.bf16.msra.mxu0 0
    %728 = vmatprep.subr.bf16.mxu0 0
    %729 = vmatpush1.bf16.msra.mxu0 0
    %730 = vmatprep.subr.bf16.mxu0 0
    %731 = vmatpush1.bf16.msra.mxu0 0
    %732 = vmatprep.mubr.bf16.mxu0 0
    %733 = vmatmul.mubr.bf16.gmra.mrb[0].mxu0 %v613
    %v734 = vpop.f32.mrb[0].mxu0
    %v735 = vadd.f32 %v650, %v734
    %v736 = vpop.f32.mrb[0].mxu0
    %v737 = vpop.f32.mrb[0].mxu0
    %v738 = vadd.f32 %v650, %v737
    %v739 = vpop.f32.mrb[0].mxu0
    %740 = vmatprep.mubr.bf16.mxu0 0
    %741 = vmatmul.mubr.bf16.gmra.mrb[0].mxu0 %v614
    %v742 = vpop.f32.mrb[0].mxu0
    %v743 = vadd.f32 %v650, %v742
    %v744 = vpop.f32.mrb[0].mxu0
    %v745 = vpop.f32.mrb[0].mxu0
    %v746 = vadd.f32 %v650, %v745
    %v747 = vpop.f32.mrb[0].mxu0
    %748 = vmatprep.mubr.bf16.mxu0 0
    %749 = vmatmul.mubr.bf16.gmra.mrb[0].mxu0 %v615
    %v750 = vpop.f32.mrb[0].mxu0
    %v751 = vadd.f32 %v650, %v750
    %v752 = vpop.f32.mrb[0].mxu0
    %v753 = vpop.f32.mrb[0].mxu0
    %v754 = vadd.f32 %v650, %v753
    %v755 = vpop.f32.mrb[0].mxu0
    %756 = vmatprep.mubr.bf16.mxu0 0
    %757 = vmatmul.mubr.bf16.gmra.mrb[0].mxu0 %v616
    %v758 = vpop.f32.mrb[0].mxu0
    %v759 = vadd.f32 %v650, %v758
    %v760 = vpop.f32.mrb[0].mxu0
    %v761 = vpop.f32.mrb[0].mxu0
    %v762 = vadd.f32 %v650, %v761
    %v763 = vpop.f32.mrb[0].mxu0
    %764 = vmatprep.mubr.bf16.mxu0 0
    %765 = vmatmul.mubr.bf16.gmra.mrb[0].mxu0 %v617
    %v766 = vpop.f32.mrb[0].mxu0
    %v767 = vadd.f32 %v650, %v766
    %v768 = vpop.f32.mrb[0].mxu0
    %v769 = vpop.f32.mrb[0].mxu0
    %v770 = vadd.f32 %v650, %v769
    %v771 = vpop.f32.mrb[0].mxu0
    %772 = vmatprep.mubr.bf16.mxu0 0
    %773 = vmatmul.mubr.bf16.gmra.mrb[0].mxu0 %v618
    %v774 = vpop.f32.mrb[0].mxu0
    %v775 = vadd.f32 %v650, %v774
    %v776 = vpop.f32.mrb[0].mxu0
    %v777 = vpop.f32.mrb[0].mxu0
    %v778 = vadd.f32 %v650, %v777
    %v779 = vpop.f32.mrb[0].mxu0
    %780 = vmatprep.mubr.bf16.mxu0 0
    %781 = vmatmul.mubr.bf16.gmra.mrb[0].mxu0 %v619
    %v782 = vpop.f32.mrb[0].mxu0
    %v783 = vadd.f32 %v650, %v782
    %v784 = vpop.f32.mrb[0].mxu0
    %v785 = vpop.f32.mrb[0].mxu0
    %v786 = vadd.f32 %v650, %v785
    %v787 = vpop.f32.mrb[0].mxu0
    %788 = vmatprep.mubr.bf16.mxu0 0
    %789 = vmatmul.mubr.bf16.gmra.mrb[0].mxu0 %v620
    %v790 = vpop.f32.mrb[0].mxu0
    %v791 = vadd.f32 %v650, %v790
    %v792 = vpop.f32.mrb[0].mxu0
    %v793 = vpop.f32.mrb[0].mxu0
    %v794 = vadd.f32 %v650, %v793
    %v795 = vpop.f32.mrb[0].mxu0
    %796 = vmatprep.mubr.bf16.mxu0 0
    %797 = vmatmul.mubr.bf16.gmra.mrb[0].mxu0 %v621
    %v798 = vpop.f32.mrb[0].mxu0
    %v799 = vadd.f32 %v650, %v798
    %v800 = vpop.f32.mrb[0].mxu0
    %v801 = vpop.f32.mrb[0].mxu0
    %v802 = vadd.f32 %v650, %v801
    %v803 = vpop.f32.mrb[0].mxu0
    %804 = vmatprep.mubr.bf16.mxu0 0
    %805 = vmatmul.mubr.bf16.gmra.mrb[0].mxu0 %v622
    %v806 = vpop.f32.mrb[0].mxu0
    %v807 = vadd.f32 %v650, %v806
    %v808 = vpop.f32.mrb[0].mxu0
    %v809 = vpop.f32.mrb[0].mxu0
    %v810 = vadd.f32 %v650, %v809
    %v811 = vpop.f32.mrb[0].mxu0
    %812 = vmatprep.mubr.bf16.mxu0 0
    %813 = vmatmul.mubr.bf16.gmra.mrb[0].mxu0 %v623
    %v814 = vpop.f32.mrb[0].mxu0
    %v815 = vadd.f32 %v650, %v814
    %v816 = vpop.f32.mrb[0].mxu0
    %v817 = vpop.f32.mrb[0].mxu0
    %v818 = vadd.f32 %v650, %v817
    %v819 = vpop.f32.mrb[0].mxu0
    %820 = vmatprep.mubr.bf16.mxu0 0
    %821 = vmatmul.mubr.bf16.gmra.mrb[0].mxu0 %v624
    %v822 = vpop.f32.mrb[0].mxu0
    %v823 = vadd.f32 %v650, %v822
    %v824 = vpop.f32.mrb[0].mxu0
    %v825 = vpop.f32.mrb[0].mxu0
    %v826 = vadd.f32 %v650, %v825
    %v827 = vpop.f32.mrb[0].mxu0
    %828 = vmatprep.mubr.bf16.mxu0 0
    %829 = vmatmul.mubr.bf16.gmra.mrb[0].mxu0 %v625
    %v830 = vpop.f32.mrb[0].mxu0
    %v831 = vadd.f32 %v650, %v830
    %v832 = vpop.f32.mrb[0].mxu0
    %v833 = vpop.f32.mrb[0].mxu0
    %v834 = vadd.f32 %v650, %v833
    %v835 = vpop.f32.mrb[0].mxu0
    %836 = vmatprep.mubr.bf16.mxu0 0
    %837 = vmatmul.mubr.bf16.gmra.mrb[0].mxu0 %v626
    %v838 = vpop.f32.mrb[0].mxu0
    %v839 = vadd.f32 %v650, %v838
    %v840 = vpop.f32.mrb[0].mxu0
    %v841 = vpop.f32.mrb[0].mxu0
    %v842 = vadd.f32 %v650, %v841
    %v843 = vpop.f32.mrb[0].mxu0
    %844 = vmatprep.mubr.bf16.mxu0 0
    %845 = vmatmul.mubr.bf16.gmra.mrb[0].mxu0 %v627
    %v846 = vpop.f32.mrb[0].mxu0
    %v847 = vadd.f32 %v650, %v846
    %v848 = vpop.f32.mrb[0].mxu0
    %v849 = vpop.f32.mrb[0].mxu0
    %v850 = vadd.f32 %v650, %v849
    %v851 = vpop.f32.mrb[0].mxu0
    %852 = vmatprep.mubr.bf16.mxu0 0
    %853 = vmatmul.mubr.bf16.gmra.mrb[0].mxu0 %v628
    %v854 = vpop.f32.mrb[0].mxu0
    %v855 = vadd.f32 %v650, %v854
    %v856 = vpop.f32.mrb[0].mxu0
    %v857 = vpop.f32.mrb[0].mxu0
    %v858 = vadd.f32 %v650, %v857
    %v859 = vpop.f32.mrb[0].mxu0
    %860 = vdwg.mxu0
    %861 = vst [vmem:[#allocation2] sm:$0xff] %v735
    %862 = vst [vmem:[#allocation2 + $0x8] sm:$0xff] %v738
    %863 = vst [vmem:[#allocation2 + $0x10] sm:$0xff] %v743
    %864 = vst [vmem:[#allocation2 + $0x18] sm:$0xff] %v746
    %865 = vst [vmem:[#allocation2 + $0x20] sm:$0xff] %v751
    %866 = vst [vmem:[#allocation2 + $0x28] sm:$0xff] %v754
    %867 = vst [vmem:[#allocation2 + $0x30] sm:$0xff] %v759
    %868 = vst [vmem:[#allocation2 + $0x38] sm:$0xff] %v762
    %869 = vst [vmem:[#allocation2 + $0x40] sm:$0xff] %v767
    %870 = vst [vmem:[#allocation2 + $0x48] sm:$0xff] %v770
    %871 = vst [vmem:[#allocation2 + $0x50] sm:$0xff] %v775
    %872 = vst [vmem:[#allocation2 + $0x58] sm:$0xff] %v778
    %873 = vst [vmem:[#allocation2 + $0x60] sm:$0xff] %v783
    %874 = vst [vmem:[#allocation2 + $0x68] sm:$0xff] %v786
    %875 = vst [vmem:[#allocation2 + $0x70] sm:$0xff] %v791
    %876 = vst [vmem:[#allocation2 + $0x78] sm:$0xff] %v794
    %877 = vst [vmem:[#allocation2 + $0x80] sm:$0xff] %v799
    %878 = vst [vmem:[#allocation2 + $0x88] sm:$0xff] %v802
    %879 = vst [vmem:[#allocation2 + $0x90] sm:$0xff] %v807
    %880 = vst [vmem:[#allocation2 + $0x98] sm:$0xff] %v810
    %881 = vst [vmem:[#allocation2 + $0xa0] sm:$0xff] %v815
    %882 = vst [vmem:[#allocation2 + $0xa8] sm:$0xff] %v818
    %883 = vst [vmem:[#allocation2 + $0xb0] sm:$0xff] %v823
    %884 = vst [vmem:[#allocation2 + $0xb8] sm:$0xff] %v826
    %885 = vst [vmem:[#allocation2 + $0xc0] sm:$0xff] %v831
    %886 = vst [vmem:[#allocation2 + $0xc8] sm:$0xff] %v834
    %887 = vst [vmem:[#allocation2 + $0xd0] sm:$0xff] %v839
    %888 = vst [vmem:[#allocation2 + $0xd8] sm:$0xff] %v842
    %889 = vst [vmem:[#allocation2 + $0xe0] sm:$0xff] %v847
    %890 = vst [vmem:[#allocation2 + $0xe8] sm:$0xff] %v850
    %891 = vst [vmem:[#allocation2 + $0xf0] sm:$0xff] %v855
    %892 = vst [vmem:[#allocation2 + $0xf8] sm:$0xff] %v858
    // Predicated region
    $region30: #{tpu_custom_call.1} parent=1 // pred_check
      _
    $region31: #{tpu_custom_call.1} parent=1 // pred_check_branch
      %894 = sbr.rel (0) target = $region33
    $region32: #{tpu_custom_call.1} parent=1 // pred_region
      %s896 = ssub.s32 4096, 4096
      %897 = vsyncadd [#allocation3], %s896
      %s898 = sshll.u32 [#allocation2], 4
      %s899 = int_to_ptr.vmem [resolvable:$true] %s898
      %904 = dma.vmem_to_hbm [thread:$0]  %s899, 4096, %s7, [#allocation3], 128, 128, 8
    $region33: #{tpu_custom_call.1} parent=1 // pred_fallthru
      _
    // Predicated region
    $region34: #{tpu_custom_call.1} parent=1 // pred_check
      _
    $region35: #{tpu_custom_call.1} parent=1 // pred_check_branch
      %906 = sbr.rel (0) target = $region37
    $region36: #{tpu_custom_call.1} parent=1 // pred_region
      %907 = dma.done [#allocation3], 4096
    $region37: #{tpu_custom_call.1} parent=1 // pred_fallthru
      _
    %908 = vsyncpa [#allocation3], 1

</llo_original>
